<compile_context>
chip_gen: v5e
topology: v5e:2x2
jax: 0.10.0
libtpu: 0.0.40
codegen_flags: <defaults>
</compile_context>

<pallas_src>
import numpy as np
import jax
import jax.numpy as jnp
from jax import lax
from jax.experimental import pallas as pl
from jax.experimental.pallas import tpu as pltpu


def _wh_phase_matrix(W: int, Wo: int) -> np.ndarray:
    """(2W, 2Wo) block-diagonal matrix.

    Columns [0, Wo)  : W-blur + stride-2 decimate of the even-h phase, with the
                       h-tap weight 2 and the 1/64 normalization folded in.
    Columns [Wo, 2Wo): same for the odd-h phase (h-tap weight 1).
    The banded structure also encodes the conv's zero padding along W.
    """
    taps = np.array([1.0, 2.0, 1.0], dtype=np.float64)
    base = np.zeros((W, Wo), dtype=np.float64)
    for wp in range(Wo):
        for k in range(3):
            w = 2 * wp - 1 + k
            if 0 <= w < W:                      # taps outside hit the zero pad
                base[w, wp] += taps[k]
    D = np.zeros((2 * W, 2 * Wo), dtype=np.float64)
    D[:W, :Wo] = 2.0 * base / 64.0              # even-h phase (h weight 2)
    D[W:, Wo:] = 1.0 * base / 64.0              # odd-h  phase (h weight 1)
    return D.astype(np.float32)


def _blur_kernel(x_ref, dw_ref, o_ref):
    # x_ref : (Bblk, To, 2*Ho, 2*W)  rows r = t_phase*Ho + h2 ; cols c = h_phase*W + w
    # dw_ref: (2*W, 2*Wo)            fused W-decimation / h-phase-weight matrix
    # o_ref : (Bblk, To, Ho, Wo)
    Bblk, To, twoHo, twoW = x_ref.shape
    Ho = twoHo // 2
    Wo = dw_ref.shape[1] // 2

    x2 = x_ref[...].reshape(Bblk * To * twoHo, twoW)

    # ---- W pass (MXU): blur + stride-2 lane decimation, both h-phases at once
    y = jnp.dot(x2, dw_ref[...], preferred_element_type=jnp.float32)  # (rows, 2*Wo)
    ye = y[:, :Wo].reshape(Bblk, To, 2, Ho, Wo)   # even-h phase (x2 weight folded in)
    yo = y[:, Wo:].reshape(Bblk, To, 2, Ho, Wo)   # odd-h  phase

    # ---- H pass (VPU): z[h'] = ye[h'] + yo[h'-1] + yo[h'] --------------------
    if Ho > 1:
        yo_shift = jnp.concatenate(
            [jnp.zeros_like(yo[:, :, :, :1, :]), yo[:, :, :, :-1, :]], axis=3)
    else:
        yo_shift = jnp.zeros_like(yo)
    z = ye + yo + yo_shift                        # (Bblk, To, 2, Ho, Wo)

    # ---- T pass (VPU): out[t'] = 2*ze[t'] + zo[t'-1] + zo[t'] ----------------
    ze = z[:, :, 0]                               # even-t phase (Bblk, To, Ho, Wo)
    zo = z[:, :, 1]                               # odd-t  phase
    if To > 1:
        zo_shift = jnp.concatenate(
            [jnp.zeros_like(zo[:, :1]), zo[:, :-1]], axis=1)
    else:
        zo_shift = jnp.zeros_like(zo)
    out = 2.0 * ze + zo + zo_shift                # (Bblk, To, Ho, Wo)

    o_ref[...] = out.astype(o_ref.dtype)


def _round_up(v, m):
    return -(-v // m) * m


def _pick_bblk(B, per_slice_bytes, budget=6 * 1024 * 1024):
    best = 1
    for d in range(1, B + 1):
        if B % d == 0 and d * per_slice_bytes <= budget:
            best = d
    return best


def blur_pooling_3d(x):
    """BlurPooling3D forward.

    x: (N, C, T, H, W) float -> (N, C, ceil(T/2), ceil(H/2), ceil(W/2)), same dtype.
    """
    N, C, T, H, W = x.shape
    orig_dtype = x.dtype
    if x.dtype not in (jnp.float32, jnp.bfloat16, jnp.float16):
        x = x.astype(jnp.float32)

    To = (T + 1) // 2
    Ho = (H + 1) // 2
    Wo = (W + 1) // 2
    B = N * C

    xb = x.reshape(B, T, H, W)
    # Odd T/H: one trailing zero plane/row == the conv's own zero padding (the W
    # edge padding is already encoded in the decimation matrix, no pad needed).
    pad_t, pad_h = 2 * To - T, 2 * Ho - H
    if pad_t or pad_h:
        xb = jnp.pad(xb, ((0, 0), (0, pad_t), (0, pad_h), (0, 0)))
    # Free row-major regrouping: (B, 2*To, 2*Ho, W) -> (B, To, 2*Ho, 2*W)
    #   row r = t_phase*Ho + h2   (t = 2*t2 + t_phase, h = 2*h2 + h_phase)
    #   col c = h_phase*W + w
    xr = xb.reshape(B, To, 2 * Ho, 2 * W)

    # Weights are exact powers of two -> lossless in bf16/f16, so the MXU can
    # consume 16-bit inputs natively; accumulation is f32 regardless.
    dw = jnp.asarray(_wh_phase_matrix(W, Wo), dtype=x.dtype)

    # Rough lane/sublane-padded VMEM estimate per (n, c) slice -> batch several
    # slices per grid step to amortize the ~0.35us/step pipeline overhead.
    itemsize = jnp.dtype(x.dtype).itemsize
    rows = _round_up(To * 2 * Ho, 8)
    in_t = rows * _round_up(2 * W, 128) * itemsize
    y_t = rows * _round_up(2 * Wo, 128) * 4
    mid_t = rows * _round_up(Wo, 128) * 4
    out_t = _round_up(To * Ho, 8) * _round_up(Wo, 128) * max(itemsize, 4)
    per_slice = 3 * in_t + y_t + 6 * mid_t + 3 * out_t
    bblk = _pick_bblk(B, per_slice)
    # TODO(synk): for Wo < 128 a lane-dense (flattened) output block would avoid
    # masked partial stores; needs an in-kernel relayout - left pending profiling.
    # TODO(synk): for very large single (n, c) volumes add a grid axis over To
    # with a 1-plane halo instead of loading the whole slice into VMEM.

    out = pl.pallas_call(
        _blur_kernel,
        out_shape=jax.ShapeDtypeStruct((B, To, Ho, Wo), x.dtype),
        grid=(B // bblk,),
        in_specs=[
            pl.BlockSpec((bblk, To, 2 * Ho, 2 * W), lambda b: (b, 0, 0, 0)),
            pl.BlockSpec((2 * W, 2 * Wo), lambda b: (0, 0)),
        ],
        out_specs=pl.BlockSpec((bblk, To, Ho, Wo), lambda b: (b, 0, 0, 0)),
        compiler_params=pltpu.CompilerParams(
            dimension_semantics=("parallel",),
            vmem_limit_bytes=32 * 1024 * 1024),
    )(xr, dw)
    return out.reshape(N, C, To, Ho, Wo).astype(orig_dtype)


def _reference(x):
    # Pure-JAX reference: depthwise conv3d, identical to F.conv3d(..., groups=C).
    N, C, T, H, W = x.shape
    f = jnp.array([1.0, 2.0, 1.0], dtype=jnp.float32)
    w3 = jnp.einsum("i,j,k->ijk", f, f, f)
    w3 = w3 / jnp.sum(w3)
    filt = jnp.broadcast_to(w3[None, None], (C, 1, 3, 3, 3))
    return lax.conv_general_dilated(
        x.astype(jnp.float32), filt,
        window_strides=(2, 2, 2),
        padding=[(1, 1)] * 3,
        dimension_numbers=("NCDHW", "OIDHW", "NCDHW"),
        feature_group_count=C).astype(x.dtype)


if __name__ == "__main__":
    key = jax.random.PRNGKey(0)
    N, C, T, H, W = 2, 4, 8, 16, 16
    x = jax.random.normal(key, (N, C, T, H, W), dtype=jnp.float32)

    y = blur_pooling_3d(x)
    jax.block_until_ready(y)

    assert y.shape == (N, C, 4, 8, 8), y.shape
    y_ref = _reference(x)
    if not np.allclose(np.asarray(y), np.asarray(y_ref), rtol=1e-4, atol=1e-4):
        raise AssertionError("Pallas BlurPooling3D mismatch vs reference conv3d")
    print("KERNEL_OK")
</pallas_src>

<mosaic_0001>
module attributes {stable_mosaic.version = 11 : i64} {
  func.func @_blur_kernel(%arg0: i32, %arg1: memref<8x4x16x32xf32, #tpu.memory_space<vmem>>, %arg2: memref<32x16xf32, #tpu.memory_space<vmem>>, %arg3: memref<8x4x8x8xf32, #tpu.memory_space<vmem>>) attributes {dimension_semantics = [#tpu.dimension_semantics<parallel>], iteration_bounds = array<i64: 1>, scalar_prefetch = 0 : i64, scratch_operands = 0 : i64, tpu.core_type = #tpu.core_type<tc>, window_params = [{transform_indices = @transform_0, window_bounds = array<i64: 8, 4, 16, 32>}, {pipeline_mode = #tpu.pipeline_mode<synchronous>, transform_indices = @transform_1, window_bounds = array<i64: 32, 16>}, {transform_indices = @transform_2, window_bounds = array<i64: 8, 4, 8, 8>}]} {
    %c0 = arith.constant 0 : index
    %c0_0 = arith.constant 0 : index
    %c0_1 = arith.constant 0 : index
    %c0_2 = arith.constant 0 : index
    %0 = vector.load %arg1[%c0, %c0_0, %c0_1, %c0_2] : memref<8x4x16x32xf32, #tpu.memory_space<vmem>>, vector<8x4x16x32xf32>
    %1 = vector.shape_cast %0 : vector<8x4x16x32xf32> to vector<512x32xf32>
    %c0_3 = arith.constant 0 : index
    %c0_4 = arith.constant 0 : index
    %2 = vector.load %arg2[%c0_3, %c0_4] : memref<32x16xf32, #tpu.memory_space<vmem>>, vector<32x16xf32>
    %cst = arith.constant dense<0.000000e+00> : vector<512x16xf32>
    %3 = tpu.matmul %1, %2, %cst {dimension_numbers = #tpu.dot_dimension_numbers<[1], [0], [0], [1], [0, 0, 1, 1], [], []>} : vector<512x32xf32>, vector<32x16xf32>, vector<512x16xf32> -> vector<512x16xf32>
    %4 = vector.extract_strided_slice %3 {offsets = [0, 0], sizes = [512, 8], strides = [1, 1]} : vector<512x16xf32> to vector<512x8xf32>
    %5 = vector.shape_cast %4 : vector<512x8xf32> to vector<8x4x2x8x8xf32>
    %6 = vector.extract_strided_slice %3 {offsets = [0, 8], sizes = [512, 8], strides = [1, 1]} : vector<512x16xf32> to vector<512x8xf32>
    %7 = vector.shape_cast %6 : vector<512x8xf32> to vector<8x4x2x8x8xf32>
    %cst_5 = arith.constant 0.000000e+00 : f32
    %8 = vector.broadcast %cst_5 : f32 to vector<8x4x2x1x8xf32>
    %9 = vector.extract_strided_slice %7 {offsets = [0, 0, 0, 0, 0], sizes = [8, 4, 2, 7, 8], strides = [1, 1, 1, 1, 1]} : vector<8x4x2x8x8xf32> to vector<8x4x2x7x8xf32>
    %10 = tpu.concatenate %8, %9 in 3 : vector<8x4x2x1x8xf32>, vector<8x4x2x7x8xf32> -> vector<8x4x2x8x8xf32>
    %11 = arith.addf %5, %7 : vector<8x4x2x8x8xf32>
    %12 = arith.addf %11, %10 : vector<8x4x2x8x8xf32>
    %13 = vector.extract_strided_slice %12 {offsets = [0, 0, 0, 0, 0], sizes = [8, 4, 1, 8, 8], strides = [1, 1, 1, 1, 1]} : vector<8x4x2x8x8xf32> to vector<8x4x1x8x8xf32>
    %14 = vector.shape_cast %13 : vector<8x4x1x8x8xf32> to vector<8x4x8x8xf32>
    %15 = vector.extract_strided_slice %12 {offsets = [0, 0, 1, 0, 0], sizes = [8, 4, 1, 8, 8], strides = [1, 1, 1, 1, 1]} : vector<8x4x2x8x8xf32> to vector<8x4x1x8x8xf32>
    %16 = vector.shape_cast %15 : vector<8x4x1x8x8xf32> to vector<8x4x8x8xf32>
    %cst_6 = arith.constant 0.000000e+00 : f32
    %17 = vector.broadcast %cst_6 : f32 to vector<8x1x8x8xf32>
    %18 = vector.extract_strided_slice %16 {offsets = [0, 0, 0, 0], sizes = [8, 3, 8, 8], strides = [1, 1, 1, 1]} : vector<8x4x8x8xf32> to vector<8x3x8x8xf32>
    %19 = tpu.concatenate %17, %18 in 1 : vector<8x1x8x8xf32>, vector<8x3x8x8xf32> -> vector<8x4x8x8xf32>
    %cst_7 = arith.constant 2.000000e+00 : f32
    %20 = vector.broadcast %cst_7 : f32 to vector<8x4x8x8xf32>
    %21 = arith.mulf %20, %14 : vector<8x4x8x8xf32>
    %22 = arith.addf %21, %16 : vector<8x4x8x8xf32>
    %23 = arith.addf %22, %19 : vector<8x4x8x8xf32>
    %c0_8 = arith.constant 0 : index
    %c0_9 = arith.constant 0 : index
    %c0_10 = arith.constant 0 : index
    %c0_11 = arith.constant 0 : index
    %24 = vector.load %arg3[%c0_8, %c0_9, %c0_10, %c0_11] : memref<8x4x8x8xf32, #tpu.memory_space<vmem>>, vector<8x4x8x8xf32>
    tpu.vector_store %arg3[%c0_8, %c0_9, %c0_10, %c0_11], %23 {strides = array<i32>} : memref<8x4x8x8xf32, #tpu.memory_space<vmem>>, vector<8x4x8x8xf32>,
    return
  }
  func.func @transform_0(%arg0: i32) -> (i32, i32, i32, i32) {
    %c0_i32 = arith.constant 0 : i32
    %c0_i32_0 = arith.constant 0 : i32
    %c0_i32_1 = arith.constant 0 : i32
    %c0_i32_2 = arith.constant 0 : i32
    return %arg0, %c0_i32, %c0_i32_0, %c0_i32_1 : i32, i32, i32, i32
  }
  func.func @transform_1(%arg0: i32) -> (i32, i32) {
    %c0_i32 = arith.constant 0 : i32
    %c0_i32_0 = arith.constant 0 : i32
    %c0_i32_1 = arith.constant 0 : i32
    return %c0_i32, %c0_i32_0 : i32, i32
  }
  func.func @transform_2(%arg0: i32) -> (i32, i32, i32, i32) {
    %c0_i32 = arith.constant 0 : i32
    %c0_i32_0 = arith.constant 0 : i32
    %c0_i32_1 = arith.constant 0 : i32
    %c0_i32_2 = arith.constant 0 : i32
    return %arg0, %c0_i32, %c0_i32_0, %c0_i32_1 : i32, i32, i32, i32
  }
}

</mosaic_0001>

<llo_original>
// kernel: tpu_custom_call.1
$region0: #{tpu_custom_call.1}
  #allocation0 [shape = 'u32[]', space=smem, size = 0x4, offset = 0x4, fixed_abs, tag = 'smem constant byte address 0x4 - core index']
  #allocation1 [shape = 'u32[72,128]{1,0:T(1,128)}', space=vmem, size = 0x9000, scoped, tag = 'internal scratch']
  %s0 = inlined_call_operand.hbm [shape: f32[8,4,16,32], index: 0, kind: input, shape index: {}]
  %s1 = inlined_call_operand.vmem [shape: f32[32,16], index: 1, kind: input, shape index: {}]
  %s2 = inlined_call_operand.hbm [shape: f32[8,4,8,8], index: 2, kind: output, shape index: {}]
  %s3 = sld [smem:[#allocation0]]
  $region22: #{tpu_custom_call.1} parent=0
    _
  %s5 = ssub.s32 1, %s3
  %s6 = scalar_select 0, %s5, %s3
  $region1: #{tpu_custom_call.1} parent=0
    #allocation2 [shape = 'u8[262144]{0}', space=vmem, size = 0x40000, scoped, tag = 'input window, operand 0, single buffered']
    #allocation3 [shape = 's32[1]{0}', space=sflag, size = 0x4, scoped, tag = 'scoped memory for tpu_custom_call.1']
    #allocation4 [shape = 's32[1]{0}', space=sflag, size = 0x4, scoped, tag = 'scoped memory for tpu_custom_call.1']
    #allocation5 [shape = 'u8[131072]{0}', space=vmem, size = 0x20000, scoped, tag = 'output window, operand 0, single buffered']
    %7 = vsyncpa [#allocation3], 0
    %8 = vsyncpa [#allocation4], 0
    // Predicated region
    $region2: #{tpu_custom_call.1} parent=1 // pred_check
      _
    $region3: #{tpu_custom_call.1} parent=1 // pred_check_branch
      %10 = sbr.rel (0) target = $region5
    $region4: #{tpu_custom_call.1} parent=1 // pred_region
      %12 = vsyncadd [#allocation3], 0
      %s13 = sshll.u32 %s0, 4
      %s14 = int_to_ptr.hbm [resolvable:$true] %s13
      %s15 = sshll.u32 [#allocation2], 4
      %s16 = int_to_ptr.vmem [resolvable:$true] %s15
      %21 = dma.hbm_to_vmem [thread:$0]  %s14, 8192, %s16, [#allocation3], 128, 128, 8
    $region5: #{tpu_custom_call.1} parent=1 // pred_fallthru
      _
    // Predicated region
    $region6: #{tpu_custom_call.1} parent=1 // pred_check
      _
    $region7: #{tpu_custom_call.1} parent=1 // pred_check_branch
      %23 = sbr.rel (0) target = $region9
    $region8: #{tpu_custom_call.1} parent=1 // pred_region
      _
    $region9: #{tpu_custom_call.1} parent=1 // pred_fallthru
      _
    // Predicated region
    $region10: #{tpu_custom_call.1} parent=1 // pred_check
      _
    $region11: #{tpu_custom_call.1} parent=1 // pred_check_branch
      %25 = sbr.rel (0) target = $region13
    $region12: #{tpu_custom_call.1} parent=1 // pred_region
      %27 = dma.done [#allocation3], 8192
    $region13: #{tpu_custom_call.1} parent=1 // pred_fallthru
      _
    %v28 = vld [vmem:[#allocation2] sm:$0xff]
    %v29 = vld [vmem:[#allocation2 + $0x8] sm:$0xff]
    %v30 = vld [vmem:[#allocation2 + $0x10] sm:$0xff]
    %v31 = vld [vmem:[#allocation2 + $0x18] sm:$0xff]
    %v32 = vld [vmem:[#allocation2 + $0x20] sm:$0xff]
    %v33 = vld [vmem:[#allocation2 + $0x28] sm:$0xff]
    %v34 = vld [vmem:[#allocation2 + $0x30] sm:$0xff]
    %v35 = vld [vmem:[#allocation2 + $0x38] sm:$0xff]
    %v36 = vld [vmem:[#allocation2 + $0x40] sm:$0xff]
    %v37 = vld [vmem:[#allocation2 + $0x48] sm:$0xff]
    %v38 = vld [vmem:[#allocation2 + $0x50] sm:$0xff]
    %v39 = vld [vmem:[#allocation2 + $0x58] sm:$0xff]
    %v40 = vld [vmem:[#allocation2 + $0x60] sm:$0xff]
    %v41 = vld [vmem:[#allocation2 + $0x68] sm:$0xff]
    %v42 = vld [vmem:[#allocation2 + $0x70] sm:$0xff]
    %v43 = vld [vmem:[#allocation2 + $0x78] sm:$0xff]
    %v44 = vld [vmem:[#allocation2 + $0x80] sm:$0xff]
    %v45 = vld [vmem:[#allocation2 + $0x88] sm:$0xff]
    %v46 = vld [vmem:[#allocation2 + $0x90] sm:$0xff]
    %v47 = vld [vmem:[#allocation2 + $0x98] sm:$0xff]
    %v48 = vld [vmem:[#allocation2 + $0xa0] sm:$0xff]
    %v49 = vld [vmem:[#allocation2 + $0xa8] sm:$0xff]
    %v50 = vld [vmem:[#allocation2 + $0xb0] sm:$0xff]
    %v51 = vld [vmem:[#allocation2 + $0xb8] sm:$0xff]
    %v52 = vld [vmem:[#allocation2 + $0xc0] sm:$0xff]
    %v53 = vld [vmem:[#allocation2 + $0xc8] sm:$0xff]
    %v54 = vld [vmem:[#allocation2 + $0xd0] sm:$0xff]
    %v55 = vld [vmem:[#allocation2 + $0xd8] sm:$0xff]
    %v56 = vld [vmem:[#allocation2 + $0xe0] sm:$0xff]
    %v57 = vld [vmem:[#allocation2 + $0xe8] sm:$0xff]
    %v58 = vld [vmem:[#allocation2 + $0xf0] sm:$0xff]
    %v59 = vld [vmem:[#allocation2 + $0xf8] sm:$0xff]
    %v60 = vld [vmem:[#allocation2 + $0x100] sm:$0xff]
    %v61 = vld [vmem:[#allocation2 + $0x108] sm:$0xff]
    %v62 = vld [vmem:[#allocation2 + $0x110] sm:$0xff]
    %v63 = vld [vmem:[#allocation2 + $0x118] sm:$0xff]
    %v64 = vld [vmem:[#allocation2 + $0x120] sm:$0xff]
    %v65 = vld [vmem:[#allocation2 + $0x128] sm:$0xff]
    %v66 = vld [vmem:[#allocation2 + $0x130] sm:$0xff]
    %v67 = vld [vmem:[#allocation2 + $0x138] sm:$0xff]
    %v68 = vld [vmem:[#allocation2 + $0x140] sm:$0xff]
    %v69 = vld [vmem:[#allocation2 + $0x148] sm:$0xff]
    %v70 = vld [vmem:[#allocation2 + $0x150] sm:$0xff]
    %v71 = vld [vmem:[#allocation2 + $0x158] sm:$0xff]
    %v72 = vld [vmem:[#allocation2 + $0x160] sm:$0xff]
    %v73 = vld [vmem:[#allocation2 + $0x168] sm:$0xff]
    %v74 = vld [vmem:[#allocation2 + $0x170] sm:$0xff]
    %v75 = vld [vmem:[#allocation2 + $0x178] sm:$0xff]
    %v76 = vld [vmem:[#allocation2 + $0x180] sm:$0xff]
    %v77 = vld [vmem:[#allocation2 + $0x188] sm:$0xff]
    %v78 = vld [vmem:[#allocation2 + $0x190] sm:$0xff]
    %v79 = vld [vmem:[#allocation2 + $0x198] sm:$0xff]
    %v80 = vld [vmem:[#allocation2 + $0x1a0] sm:$0xff]
    %v81 = vld [vmem:[#allocation2 + $0x1a8] sm:$0xff]
    %v82 = vld [vmem:[#allocation2 + $0x1b0] sm:$0xff]
    %v83 = vld [vmem:[#allocation2 + $0x1b8] sm:$0xff]
    %v84 = vld [vmem:[#allocation2 + $0x1c0] sm:$0xff]
    %v85 = vld [vmem:[#allocation2 + $0x1c8] sm:$0xff]
    %v86 = vld [vmem:[#allocation2 + $0x1d0] sm:$0xff]
    %v87 = vld [vmem:[#allocation2 + $0x1d8] sm:$0xff]
    %v88 = vld [vmem:[#allocation2 + $0x1e0] sm:$0xff]
    %v89 = vld [vmem:[#allocation2 + $0x1e8] sm:$0xff]
    %v90 = vld [vmem:[#allocation2 + $0x1f0] sm:$0xff]
    %v91 = vld [vmem:[#allocation2 + $0x1f8] sm:$0xff]
    %v92 = vld [vmem:[%s1] sm:$0xff]
    %v93 = vld [vmem:[%s1 + $0x8] sm:$0xff]
    %v94 = vld [vmem:[%s1 + $0x10] sm:$0xff]
    %v95 = vld [vmem:[%s1 + $0x18] sm:$0xff]
    %vm96 = vcmask 261120
    %v98 = vsel %vm96, %v28, 0
    %v101 = vsel %vm96, %v29, 0
    %v104 = vsel %vm96, %v30, 0
    %v107 = vsel %vm96, %v31, 0
    %v110 = vsel %vm96, %v32, 0
    %v113 = vsel %vm96, %v33, 0
    %v116 = vsel %vm96, %v34, 0
    %v119 = vsel %vm96, %v35, 0
    %v122 = vsel %vm96, %v36, 0
    %v125 = vsel %vm96, %v37, 0
    %v128 = vsel %vm96, %v38, 0
    %v131 = vsel %vm96, %v39, 0
    %v134 = vsel %vm96, %v40, 0
    %v137 = vsel %vm96, %v41, 0
    %v140 = vsel %vm96, %v42, 0
    %v143 = vsel %vm96, %v43, 0
    %v146 = vsel %vm96, %v44, 0
    %v149 = vsel %vm96, %v45, 0
    %v152 = vsel %vm96, %v46, 0
    %v155 = vsel %vm96, %v47, 0
    %v158 = vsel %vm96, %v48, 0
    %v161 = vsel %vm96, %v49, 0
    %v164 = vsel %vm96, %v50, 0
    %v167 = vsel %vm96, %v51, 0
    %v170 = vsel %vm96, %v52, 0
    %v173 = vsel %vm96, %v53, 0
    %v176 = vsel %vm96, %v54, 0
    %v179 = vsel %vm96, %v55, 0
    %v182 = vsel %vm96, %v56, 0
    %v185 = vsel %vm96, %v57, 0
    %v188 = vsel %vm96, %v58, 0
    %v191 = vsel %vm96, %v59, 0
    %v194 = vsel %vm96, %v60, 0
    %v197 = vsel %vm96, %v61, 0
    %v200 = vsel %vm96, %v62, 0
    %v203 = vsel %vm96, %v63, 0
    %v206 = vsel %vm96, %v64, 0
    %v209 = vsel %vm96, %v65, 0
    %v212 = vsel %vm96, %v66, 0
    %v215 = vsel %vm96, %v67, 0
    %v218 = vsel %vm96, %v68, 0
    %v221 = vsel %vm96, %v69, 0
    %v224 = vsel %vm96, %v70, 0
    %v227 = vsel %vm96, %v71, 0
    %v230 = vsel %vm96, %v72, 0
    %v233 = vsel %vm96, %v73, 0
    %v236 = vsel %vm96, %v74, 0
    %v239 = vsel %vm96, %v75, 0
    %v242 = vsel %vm96, %v76, 0
    %v245 = vsel %vm96, %v77, 0
    %v248 = vsel %vm96, %v78, 0
    %v251 = vsel %vm96, %v79, 0
    %v254 = vsel %vm96, %v80, 0
    %v257 = vsel %vm96, %v81, 0
    %v260 = vsel %vm96, %v82, 0
    %v263 = vsel %vm96, %v83, 0
    %v266 = vsel %vm96, %v84, 0
    %v269 = vsel %vm96, %v85, 0
    %v272 = vsel %vm96, %v86, 0
    %v275 = vsel %vm96, %v87, 0
    %v278 = vsel %vm96, %v88, 0
    %v281 = vsel %vm96, %v89, 0
    %v284 = vsel %vm96, %v90, 0
    %v287 = vsel %vm96, %v91, 0
    %289 = vmatpush.msra.mxu0 0.0
    %290 = vmatpush.msra.mxu0 0.0
    %291 = vmatpush.msra.mxu0 0.0
    %292 = vmatpush.msra.mxu0 0.0
    %293 = vmatpush.msra.mxu0 0.0
    %294 = vmatpush.msra.mxu0 0.0
    %295 = vmatpush.msra.mxu0 0.0
    %296 = vmatpush.msra.mxu0 0.0
    %297 = vmatpush.msra.mxu0 0.0
    %298 = vmatpush.msra.mxu0 0.0
    %299 = vmatpush.msra.mxu0 0.0
    %300 = vmatpush.msra.mxu0 0.0
    %301 = vmatpush.msra.mxu0 %v95
    %302 = vmatpush.msra.mxu0 %v94
    %303 = vmatpush.msra.mxu0 %v93
    %304 = vmatpush.msra.mxu0 %v92
    %305 = vmatmul.f32.gmra.mxu0 %v98
    %v306 = vpop.f32.mrf.mxu0
    %v307 = vadd.f32 0.0, %v306
    %308 = vmatmul.f32.gmra.mxu0 %v101
    %v309 = vpop.f32.mrf.mxu0
    %v310 = vadd.f32 0.0, %v309
    %311 = vmatmul.f32.gmra.mxu0 %v104
    %v312 = vpop.f32.mrf.mxu0
    %v313 = vadd.f32 0.0, %v312
    %314 = vmatmul.f32.gmra.mxu0 %v107
    %v315 = vpop.f32.mrf.mxu0
    %v316 = vadd.f32 0.0, %v315
    %317 = vmatmul.f32.gmra.mxu0 %v110
    %v318 = vpop.f32.mrf.mxu0
    %v319 = vadd.f32 0.0, %v318
    %320 = vmatmul.f32.gmra.mxu0 %v113
    %v321 = vpop.f32.mrf.mxu0
    %v322 = vadd.f32 0.0, %v321
    %323 = vmatmul.f32.gmra.mxu0 %v116
    %v324 = vpop.f32.mrf.mxu0
    %v325 = vadd.f32 0.0, %v324
    %326 = vmatmul.f32.gmra.mxu0 %v119
    %v327 = vpop.f32.mrf.mxu0
    %v328 = vadd.f32 0.0, %v327
    %329 = vmatmul.f32.gmra.mxu0 %v122
    %v330 = vpop.f32.mrf.mxu0
    %v331 = vadd.f32 0.0, %v330
    %332 = vmatmul.f32.gmra.mxu0 %v125
    %v333 = vpop.f32.mrf.mxu0
    %v334 = vadd.f32 0.0, %v333
    %335 = vmatmul.f32.gmra.mxu0 %v128
    %v336 = vpop.f32.mrf.mxu0
    %v337 = vadd.f32 0.0, %v336
    %338 = vmatmul.f32.gmra.mxu0 %v131
    %v339 = vpop.f32.mrf.mxu0
    %v340 = vadd.f32 0.0, %v339
    %341 = vmatmul.f32.gmra.mxu0 %v134
    %v342 = vpop.f32.mrf.mxu0
    %v343 = vadd.f32 0.0, %v342
    %344 = vmatmul.f32.gmra.mxu0 %v137
    %v345 = vpop.f32.mrf.mxu0
    %v346 = vadd.f32 0.0, %v345
    %347 = vmatmul.f32.gmra.mxu0 %v140
    %v348 = vpop.f32.mrf.mxu0
    %v349 = vadd.f32 0.0, %v348
    %350 = vmatmul.f32.gmra.mxu0 %v143
    %v351 = vpop.f32.mrf.mxu0
    %v352 = vadd.f32 0.0, %v351
    %353 = vmatmul.f32.gmra.mxu0 %v146
    %v354 = vpop.f32.mrf.mxu0
    %v355 = vadd.f32 0.0, %v354
    %356 = vmatmul.f32.gmra.mxu0 %v149
    %v357 = vpop.f32.mrf.mxu0
    %v358 = vadd.f32 0.0, %v357
    %359 = vmatmul.f32.gmra.mxu0 %v152
    %v360 = vpop.f32.mrf.mxu0
    %v361 = vadd.f32 0.0, %v360
    %362 = vmatmul.f32.gmra.mxu0 %v155
    %v363 = vpop.f32.mrf.mxu0
    %v364 = vadd.f32 0.0, %v363
    %365 = vmatmul.f32.gmra.mxu0 %v158
    %v366 = vpop.f32.mrf.mxu0
    %v367 = vadd.f32 0.0, %v366
    %368 = vmatmul.f32.gmra.mxu0 %v161
    %v369 = vpop.f32.mrf.mxu0
    %v370 = vadd.f32 0.0, %v369
    %371 = vmatmul.f32.gmra.mxu0 %v164
    %v372 = vpop.f32.mrf.mxu0
    %v373 = vadd.f32 0.0, %v372
    %374 = vmatmul.f32.gmra.mxu0 %v167
    %v375 = vpop.f32.mrf.mxu0
    %v376 = vadd.f32 0.0, %v375
    %377 = vmatmul.f32.gmra.mxu0 %v170
    %v378 = vpop.f32.mrf.mxu0
    %v379 = vadd.f32 0.0, %v378
    %380 = vmatmul.f32.gmra.mxu0 %v173
    %v381 = vpop.f32.mrf.mxu0
    %v382 = vadd.f32 0.0, %v381
    %383 = vmatmul.f32.gmra.mxu0 %v176
    %v384 = vpop.f32.mrf.mxu0
    %v385 = vadd.f32 0.0, %v384
    %386 = vmatmul.f32.gmra.mxu0 %v179
    %v387 = vpop.f32.mrf.mxu0
    %v388 = vadd.f32 0.0, %v387
    %389 = vmatmul.f32.gmra.mxu0 %v182
    %v390 = vpop.f32.mrf.mxu0
    %v391 = vadd.f32 0.0, %v390
    %392 = vmatmul.f32.gmra.mxu0 %v185
    %v393 = vpop.f32.mrf.mxu0
    %v394 = vadd.f32 0.0, %v393
    %395 = vmatmul.f32.gmra.mxu0 %v188
    %v396 = vpop.f32.mrf.mxu0
    %v397 = vadd.f32 0.0, %v396
    %398 = vmatmul.f32.gmra.mxu0 %v191
    %v399 = vpop.f32.mrf.mxu0
    %v400 = vadd.f32 0.0, %v399
    %401 = vmatmul.f32.gmra.mxu0 %v194
    %v402 = vpop.f32.mrf.mxu0
    %v403 = vadd.f32 0.0, %v402
    %404 = vmatmul.f32.gmra.mxu0 %v197
    %v405 = vpop.f32.mrf.mxu0
    %v406 = vadd.f32 0.0, %v405
    %407 = vmatmul.f32.gmra.mxu0 %v200
    %v408 = vpop.f32.mrf.mxu0
    %v409 = vadd.f32 0.0, %v408
    %410 = vmatmul.f32.gmra.mxu0 %v203
    %v411 = vpop.f32.mrf.mxu0
    %v412 = vadd.f32 0.0, %v411
    %413 = vmatmul.f32.gmra.mxu0 %v206
    %v414 = vpop.f32.mrf.mxu0
    %v415 = vadd.f32 0.0, %v414
    %416 = vmatmul.f32.gmra.mxu0 %v209
    %v417 = vpop.f32.mrf.mxu0
    %v418 = vadd.f32 0.0, %v417
    %419 = vmatmul.f32.gmra.mxu0 %v212
    %v420 = vpop.f32.mrf.mxu0
    %v421 = vadd.f32 0.0, %v420
    %422 = vmatmul.f32.gmra.mxu0 %v215
    %v423 = vpop.f32.mrf.mxu0
    %v424 = vadd.f32 0.0, %v423
    %425 = vmatmul.f32.gmra.mxu0 %v218
    %v426 = vpop.f32.mrf.mxu0
    %v427 = vadd.f32 0.0, %v426
    %428 = vmatmul.f32.gmra.mxu0 %v221
    %v429 = vpop.f32.mrf.mxu0
    %v430 = vadd.f32 0.0, %v429
    %431 = vmatmul.f32.gmra.mxu0 %v224
    %v432 = vpop.f32.mrf.mxu0
    %v433 = vadd.f32 0.0, %v432
    %434 = vmatmul.f32.gmra.mxu0 %v227
    %v435 = vpop.f32.mrf.mxu0
    %v436 = vadd.f32 0.0, %v435
    %437 = vmatmul.f32.gmra.mxu0 %v230
    %v438 = vpop.f32.mrf.mxu0
    %v439 = vadd.f32 0.0, %v438
    %440 = vmatmul.f32.gmra.mxu0 %v233
    %v441 = vpop.f32.mrf.mxu0
    %v442 = vadd.f32 0.0, %v441
    %443 = vmatmul.f32.gmra.mxu0 %v236
    %v444 = vpop.f32.mrf.mxu0
    %v445 = vadd.f32 0.0, %v444
    %446 = vmatmul.f32.gmra.mxu0 %v239
    %v447 = vpop.f32.mrf.mxu0
    %v448 = vadd.f32 0.0, %v447
    %449 = vmatmul.f32.gmra.mxu0 %v242
    %v450 = vpop.f32.mrf.mxu0
    %v451 = vadd.f32 0.0, %v450
    %452 = vmatmul.f32.gmra.mxu0 %v245
    %v453 = vpop.f32.mrf.mxu0
    %v454 = vadd.f32 0.0, %v453
    %455 = vmatmul.f32.gmra.mxu0 %v248
    %v456 = vpop.f32.mrf.mxu0
    %v457 = vadd.f32 0.0, %v456
    %458 = vmatmul.f32.gmra.mxu0 %v251
    %v459 = vpop.f32.mrf.mxu0
    %v460 = vadd.f32 0.0, %v459
    %461 = vmatmul.f32.gmra.mxu0 %v254
    %v462 = vpop.f32.mrf.mxu0
    %v463 = vadd.f32 0.0, %v462
    %464 = vmatmul.f32.gmra.mxu0 %v257
    %v465 = vpop.f32.mrf.mxu0
    %v466 = vadd.f32 0.0, %v465
    %467 = vmatmul.f32.gmra.mxu0 %v260
    %v468 = vpop.f32.mrf.mxu0
    %v469 = vadd.f32 0.0, %v468
    %470 = vmatmul.f32.gmra.mxu0 %v263
    %v471 = vpop.f32.mrf.mxu0
    %v472 = vadd.f32 0.0, %v471
    %473 = vmatmul.f32.gmra.mxu0 %v266
    %v474 = vpop.f32.mrf.mxu0
    %v475 = vadd.f32 0.0, %v474
    %476 = vmatmul.f32.gmra.mxu0 %v269
    %v477 = vpop.f32.mrf.mxu0
    %v478 = vadd.f32 0.0, %v477
    %479 = vmatmul.f32.gmra.mxu0 %v272
    %v480 = vpop.f32.mrf.mxu0
    %v481 = vadd.f32 0.0, %v480
    %482 = vmatmul.f32.gmra.mxu0 %v275
    %v483 = vpop.f32.mrf.mxu0
    %v484 = vadd.f32 0.0, %v483
    %485 = vmatmul.f32.gmra.mxu0 %v278
    %v486 = vpop.f32.mrf.mxu0
    %v487 = vadd.f32 0.0, %v486
    %488 = vmatmul.f32.gmra.mxu0 %v281
    %v489 = vpop.f32.mrf.mxu0
    %v490 = vadd.f32 0.0, %v489
    %491 = vmatmul.f32.gmra.mxu0 %v284
    %v492 = vpop.f32.mrf.mxu0
    %v493 = vadd.f32 0.0, %v492
    %494 = vmatmul.f32.gmra.mxu0 %v287
    %v495 = vpop.f32.mrf.mxu0
    %v496 = vadd.f32 0.0, %v495
    %497 = vdwg.mxu0
    %v562 = vrot.slane %v307, 7
    %v563 = vrot.slane %v310, 7
    %v564 = vrot.slane %v313, 7
    %v565 = vrot.slane %v316, 7
    %v566 = vrot.slane %v319, 7
    %v567 = vrot.slane %v322, 7
    %v568 = vrot.slane %v325, 7
    %v569 = vrot.slane %v328, 7
    %v570 = vrot.slane %v331, 7
    %v571 = vrot.slane %v334, 7
    %v572 = vrot.slane %v337, 7
    %v573 = vrot.slane %v340, 7
    %v574 = vrot.slane %v343, 7
    %v575 = vrot.slane %v346, 7
    %v576 = vrot.slane %v349, 7
    %v577 = vrot.slane %v352, 7
    %v578 = vrot.slane %v355, 7
    %v579 = vrot.slane %v358, 7
    %v580 = vrot.slane %v361, 7
    %v581 = vrot.slane %v364, 7
    %v582 = vrot.slane %v367, 7
    %v583 = vrot.slane %v370, 7
    %v584 = vrot.slane %v373, 7
    %v585 = vrot.slane %v376, 7
    %v586 = vrot.slane %v379, 7
    %v587 = vrot.slane %v382, 7
    %v588 = vrot.slane %v385, 7
    %v589 = vrot.slane %v388, 7
    %v590 = vrot.slane %v391, 7
    %v591 = vrot.slane %v394, 7
    %v592 = vrot.slane %v397, 7
    %v593 = vrot.slane %v400, 7
    %v594 = vrot.slane %v403, 7
    %v595 = vrot.slane %v406, 7
    %v596 = vrot.slane %v409, 7
    %v597 = vrot.slane %v412, 7
    %v598 = vrot.slane %v415, 7
    %v599 = vrot.slane %v418, 7
    %v600 = vrot.slane %v421, 7
    %v601 = vrot.slane %v424, 7
    %v602 = vrot.slane %v427, 7
    %v603 = vrot.slane %v430, 7
    %v604 = vrot.slane %v433, 7
    %v605 = vrot.slane %v436, 7
    %v606 = vrot.slane %v439, 7
    %v607 = vrot.slane %v442, 7
    %v608 = vrot.slane %v445, 7
    %v609 = vrot.slane %v448, 7
    %v610 = vrot.slane %v451, 7
    %v611 = vrot.slane %v454, 7
    %v612 = vrot.slane %v457, 7
    %v613 = vrot.slane %v460, 7
    %v614 = vrot.slane %v463, 7
    %v615 = vrot.slane %v466, 7
    %v616 = vrot.slane %v469, 7
    %v617 = vrot.slane %v472, 7
    %v618 = vrot.slane %v475, 7
    %v619 = vrot.slane %v478, 7
    %v620 = vrot.slane %v481, 7
    %v621 = vrot.slane %v484, 7
    %v622 = vrot.slane %v487, 7
    %v623 = vrot.slane %v490, 7
    %v624 = vrot.slane %v493, 7
    %v625 = vrot.slane %v496, 7
    %626 = vrot.lane.b32.xlu0 %v562, 120
    %v627 = vpop.permute.xlu0 %626
    %628 = vrot.lane.b32.xlu0 %v563, 120
    %v629 = vpop.permute.xlu0 %628
    %630 = vrot.lane.b32.xlu0 %v564, 120
    %v631 = vpop.permute.xlu0 %630
    %632 = vrot.lane.b32.xlu0 %v565, 120
    %v633 = vpop.permute.xlu0 %632
    %634 = vrot.lane.b32.xlu0 %v566, 120
    %v635 = vpop.permute.xlu0 %634
    %636 = vrot.lane.b32.xlu0 %v567, 120
    %v637 = vpop.permute.xlu0 %636
    %638 = vrot.lane.b32.xlu0 %v568, 120
    %v639 = vpop.permute.xlu0 %638
    %640 = vrot.lane.b32.xlu0 %v569, 120
    %v641 = vpop.permute.xlu0 %640
    %642 = vrot.lane.b32.xlu0 %v570, 120
    %v643 = vpop.permute.xlu0 %642
    %644 = vrot.lane.b32.xlu0 %v571, 120
    %v645 = vpop.permute.xlu0 %644
    %646 = vrot.lane.b32.xlu0 %v572, 120
    %v647 = vpop.permute.xlu0 %646
    %648 = vrot.lane.b32.xlu0 %v573, 120
    %v649 = vpop.permute.xlu0 %648
    %650 = vrot.lane.b32.xlu0 %v574, 120
    %v651 = vpop.permute.xlu0 %650
    %652 = vrot.lane.b32.xlu0 %v575, 120
    %v653 = vpop.permute.xlu0 %652
    %654 = vrot.lane.b32.xlu0 %v576, 120
    %v655 = vpop.permute.xlu0 %654
    %656 = vrot.lane.b32.xlu0 %v577, 120
    %v657 = vpop.permute.xlu0 %656
    %658 = vrot.lane.b32.xlu0 %v578, 120
    %v659 = vpop.permute.xlu0 %658
    %660 = vrot.lane.b32.xlu0 %v579, 120
    %v661 = vpop.permute.xlu0 %660
    %662 = vrot.lane.b32.xlu0 %v580, 120
    %v663 = vpop.permute.xlu0 %662
    %664 = vrot.lane.b32.xlu0 %v581, 120
    %v665 = vpop.permute.xlu0 %664
    %666 = vrot.lane.b32.xlu0 %v582, 120
    %v667 = vpop.permute.xlu0 %666
    %668 = vrot.lane.b32.xlu0 %v583, 120
    %v669 = vpop.permute.xlu0 %668
    %670 = vrot.lane.b32.xlu0 %v584, 120
    %v671 = vpop.permute.xlu0 %670
    %672 = vrot.lane.b32.xlu0 %v585, 120
    %v673 = vpop.permute.xlu0 %672
    %674 = vrot.lane.b32.xlu0 %v586, 120
    %v675 = vpop.permute.xlu0 %674
    %676 = vrot.lane.b32.xlu0 %v587, 120
    %v677 = vpop.permute.xlu0 %676
    %678 = vrot.lane.b32.xlu0 %v588, 120
    %v679 = vpop.permute.xlu0 %678
    %680 = vrot.lane.b32.xlu0 %v589, 120
    %v681 = vpop.permute.xlu0 %680
    %682 = vrot.lane.b32.xlu0 %v590, 120
    %v683 = vpop.permute.xlu0 %682
    %684 = vrot.lane.b32.xlu0 %v591, 120
    %v685 = vpop.permute.xlu0 %684
    %686 = vrot.lane.b32.xlu0 %v592, 120
    %v687 = vpop.permute.xlu0 %686
    %688 = vrot.lane.b32.xlu0 %v593, 120
    %v689 = vpop.permute.xlu0 %688
    %690 = vrot.lane.b32.xlu0 %v594, 120
    %v691 = vpop.permute.xlu0 %690
    %692 = vrot.lane.b32.xlu0 %v595, 120
    %v693 = vpop.permute.xlu0 %692
    %694 = vrot.lane.b32.xlu0 %v596, 120
    %v695 = vpop.permute.xlu0 %694
    %696 = vrot.lane.b32.xlu0 %v597, 120
    %v697 = vpop.permute.xlu0 %696
    %698 = vrot.lane.b32.xlu0 %v598, 120
    %v699 = vpop.permute.xlu0 %698
    %700 = vrot.lane.b32.xlu0 %v599, 120
    %v701 = vpop.permute.xlu0 %700
    %702 = vrot.lane.b32.xlu0 %v600, 120
    %v703 = vpop.permute.xlu0 %702
    %704 = vrot.lane.b32.xlu0 %v601, 120
    %v705 = vpop.permute.xlu0 %704
    %706 = vrot.lane.b32.xlu0 %v602, 120
    %v707 = vpop.permute.xlu0 %706
    %708 = vrot.lane.b32.xlu0 %v603, 120
    %v709 = vpop.permute.xlu0 %708
    %710 = vrot.lane.b32.xlu0 %v604, 120
    %v711 = vpop.permute.xlu0 %710
    %712 = vrot.lane.b32.xlu0 %v605, 120
    %v713 = vpop.permute.xlu0 %712
    %714 = vrot.lane.b32.xlu0 %v606, 120
    %v715 = vpop.permute.xlu0 %714
    %716 = vrot.lane.b32.xlu0 %v607, 120
    %v717 = vpop.permute.xlu0 %716
    %718 = vrot.lane.b32.xlu0 %v608, 120
    %v719 = vpop.permute.xlu0 %718
    %720 = vrot.lane.b32.xlu0 %v609, 120
    %v721 = vpop.permute.xlu0 %720
    %722 = vrot.lane.b32.xlu0 %v610, 120
    %v723 = vpop.permute.xlu0 %722
    %724 = vrot.lane.b32.xlu0 %v611, 120
    %v725 = vpop.permute.xlu0 %724
    %726 = vrot.lane.b32.xlu0 %v612, 120
    %v727 = vpop.permute.xlu0 %726
    %728 = vrot.lane.b32.xlu0 %v613, 120
    %v729 = vpop.permute.xlu0 %728
    %730 = vrot.lane.b32.xlu0 %v614, 120
    %v731 = vpop.permute.xlu0 %730
    %732 = vrot.lane.b32.xlu0 %v615, 120
    %v733 = vpop.permute.xlu0 %732
    %734 = vrot.lane.b32.xlu0 %v616, 120
    %v735 = vpop.permute.xlu0 %734
    %736 = vrot.lane.b32.xlu0 %v617, 120
    %v737 = vpop.permute.xlu0 %736
    %738 = vrot.lane.b32.xlu0 %v618, 120
    %v739 = vpop.permute.xlu0 %738
    %740 = vrot.lane.b32.xlu0 %v619, 120
    %v741 = vpop.permute.xlu0 %740
    %742 = vrot.lane.b32.xlu0 %v620, 120
    %v743 = vpop.permute.xlu0 %742
    %744 = vrot.lane.b32.xlu0 %v621, 120
    %v745 = vpop.permute.xlu0 %744
    %746 = vrot.lane.b32.xlu0 %v622, 120
    %v747 = vpop.permute.xlu0 %746
    %748 = vrot.lane.b32.xlu0 %v623, 120
    %v749 = vpop.permute.xlu0 %748
    %750 = vrot.lane.b32.xlu0 %v624, 120
    %v751 = vpop.permute.xlu0 %750
    %752 = vrot.lane.b32.xlu0 %v625, 120
    %v753 = vpop.permute.xlu0 %752
    %vm818 = vcmask 1040384
    %v819 = vsel %vm818, 0.0, %v627
    %v820 = vsel %vm818, 0.0, %v629
    %v821 = vsel %vm818, 0.0, %v631
    %v822 = vsel %vm818, 0.0, %v633
    %v823 = vsel %vm818, 0.0, %v635
    %v824 = vsel %vm818, 0.0, %v637
    %v825 = vsel %vm818, 0.0, %v639
    %v826 = vsel %vm818, 0.0, %v641
    %v827 = vsel %vm818, 0.0, %v643
    %v828 = vsel %vm818, 0.0, %v645
    %v829 = vsel %vm818, 0.0, %v647
    %v830 = vsel %vm818, 0.0, %v649
    %v831 = vsel %vm818, 0.0, %v651
    %v832 = vsel %vm818, 0.0, %v653
    %v833 = vsel %vm818, 0.0, %v655
    %v834 = vsel %vm818, 0.0, %v657
    %v835 = vsel %vm818, 0.0, %v659
    %v836 = vsel %vm818, 0.0, %v661
    %v837 = vsel %vm818, 0.0, %v663
    %v838 = vsel %vm818, 0.0, %v665
    %v839 = vsel %vm818, 0.0, %v667
    %v840 = vsel %vm818, 0.0, %v669
    %v841 = vsel %vm818, 0.0, %v671
    %v842 = vsel %vm818, 0.0, %v673
    %v843 = vsel %vm818, 0.0, %v675
    %v844 = vsel %vm818, 0.0, %v677
    %v845 = vsel %vm818, 0.0, %v679
    %v846 = vsel %vm818, 0.0, %v681
    %v847 = vsel %vm818, 0.0, %v683
    %v848 = vsel %vm818, 0.0, %v685
    %v849 = vsel %vm818, 0.0, %v687
    %v850 = vsel %vm818, 0.0, %v689
    %v851 = vsel %vm818, 0.0, %v691
    %v852 = vsel %vm818, 0.0, %v693
    %v853 = vsel %vm818, 0.0, %v695
    %v854 = vsel %vm818, 0.0, %v697
    %v855 = vsel %vm818, 0.0, %v699
    %v856 = vsel %vm818, 0.0, %v701
    %v857 = vsel %vm818, 0.0, %v703
    %v858 = vsel %vm818, 0.0, %v705
    %v859 = vsel %vm818, 0.0, %v707
    %v860 = vsel %vm818, 0.0, %v709
    %v861 = vsel %vm818, 0.0, %v711
    %v862 = vsel %vm818, 0.0, %v713
    %v863 = vsel %vm818, 0.0, %v715
    %v864 = vsel %vm818, 0.0, %v717
    %v865 = vsel %vm818, 0.0, %v719
    %v866 = vsel %vm818, 0.0, %v721
    %v867 = vsel %vm818, 0.0, %v723
    %v868 = vsel %vm818, 0.0, %v725
    %v869 = vsel %vm818, 0.0, %v727
    %v870 = vsel %vm818, 0.0, %v729
    %v871 = vsel %vm818, 0.0, %v731
    %v872 = vsel %vm818, 0.0, %v733
    %v873 = vsel %vm818, 0.0, %v735
    %v874 = vsel %vm818, 0.0, %v737
    %v875 = vsel %vm818, 0.0, %v739
    %v876 = vsel %vm818, 0.0, %v741
    %v877 = vsel %vm818, 0.0, %v743
    %v878 = vsel %vm818, 0.0, %v745
    %v879 = vsel %vm818, 0.0, %v747
    %v880 = vsel %vm818, 0.0, %v749
    %v881 = vsel %vm818, 0.0, %v751
    %v882 = vsel %vm818, 0.0, %v753
    %883 = vrot.lane.b32.xlu0 %v307, 120
    %v884 = vpop.permute.xlu0 %883
    %885 = vrot.lane.b32.xlu0 %v310, 120
    %v886 = vpop.permute.xlu0 %885
    %887 = vrot.lane.b32.xlu0 %v313, 120
    %v888 = vpop.permute.xlu0 %887
    %889 = vrot.lane.b32.xlu0 %v316, 120
    %v890 = vpop.permute.xlu0 %889
    %891 = vrot.lane.b32.xlu0 %v319, 120
    %v892 = vpop.permute.xlu0 %891
    %893 = vrot.lane.b32.xlu0 %v322, 120
    %v894 = vpop.permute.xlu0 %893
    %895 = vrot.lane.b32.xlu0 %v325, 120
    %v896 = vpop.permute.xlu0 %895
    %897 = vrot.lane.b32.xlu0 %v328, 120
    %v898 = vpop.permute.xlu0 %897
    %899 = vrot.lane.b32.xlu0 %v331, 120
    %v900 = vpop.permute.xlu0 %899
    %901 = vrot.lane.b32.xlu0 %v334, 120
    %v902 = vpop.permute.xlu0 %901
    %903 = vrot.lane.b32.xlu0 %v337, 120
    %v904 = vpop.permute.xlu0 %903
    %905 = vrot.lane.b32.xlu0 %v340, 120
    %v906 = vpop.permute.xlu0 %905
    %907 = vrot.lane.b32.xlu0 %v343, 120
    %v908 = vpop.permute.xlu0 %907
    %909 = vrot.lane.b32.xlu0 %v346, 120
    %v910 = vpop.permute.xlu0 %909
    %911 = vrot.lane.b32.xlu0 %v349, 120
    %v912 = vpop.permute.xlu0 %911
    %913 = vrot.lane.b32.xlu0 %v352, 120
    %v914 = vpop.permute.xlu0 %913
    %915 = vrot.lane.b32.xlu0 %v355, 120
    %v916 = vpop.permute.xlu0 %915
    %917 = vrot.lane.b32.xlu0 %v358, 120
    %v918 = vpop.permute.xlu0 %917
    %919 = vrot.lane.b32.xlu0 %v361, 120
    %v920 = vpop.permute.xlu0 %919
    %921 = vrot.lane.b32.xlu0 %v364, 120
    %v922 = vpop.permute.xlu0 %921
    %923 = vrot.lane.b32.xlu0 %v367, 120
    %v924 = vpop.permute.xlu0 %923
    %925 = vrot.lane.b32.xlu0 %v370, 120
    %v926 = vpop.permute.xlu0 %925
    %927 = vrot.lane.b32.xlu0 %v373, 120
    %v928 = vpop.permute.xlu0 %927
    %929 = vrot.lane.b32.xlu0 %v376, 120
    %v930 = vpop.permute.xlu0 %929
    %931 = vrot.lane.b32.xlu0 %v379, 120
    %v932 = vpop.permute.xlu0 %931
    %933 = vrot.lane.b32.xlu0 %v382, 120
    %v934 = vpop.permute.xlu0 %933
    %935 = vrot.lane.b32.xlu0 %v385, 120
    %v936 = vpop.permute.xlu0 %935
    %937 = vrot.lane.b32.xlu0 %v388, 120
    %v938 = vpop.permute.xlu0 %937
    %939 = vrot.lane.b32.xlu0 %v391, 120
    %v940 = vpop.permute.xlu0 %939
    %941 = vrot.lane.b32.xlu0 %v394, 120
    %v942 = vpop.permute.xlu0 %941
    %943 = vrot.lane.b32.xlu0 %v397, 120
    %v944 = vpop.permute.xlu0 %943
    %945 = vrot.lane.b32.xlu0 %v400, 120
    %v946 = vpop.permute.xlu0 %945
    %947 = vrot.lane.b32.xlu0 %v403, 120
    %v948 = vpop.permute.xlu0 %947
    %949 = vrot.lane.b32.xlu0 %v406, 120
    %v950 = vpop.permute.xlu0 %949
    %951 = vrot.lane.b32.xlu0 %v409, 120
    %v952 = vpop.permute.xlu0 %951
    %953 = vrot.lane.b32.xlu0 %v412, 120
    %v954 = vpop.permute.xlu0 %953
    %955 = vrot.lane.b32.xlu0 %v415, 120
    %v956 = vpop.permute.xlu0 %955
    %957 = vrot.lane.b32.xlu0 %v418, 120
    %v958 = vpop.permute.xlu0 %957
    %959 = vrot.lane.b32.xlu0 %v421, 120
    %v960 = vpop.permute.xlu0 %959
    %961 = vrot.lane.b32.xlu0 %v424, 120
    %v962 = vpop.permute.xlu0 %961
    %963 = vrot.lane.b32.xlu0 %v427, 120
    %v964 = vpop.permute.xlu0 %963
    %965 = vrot.lane.b32.xlu0 %v430, 120
    %v966 = vpop.permute.xlu0 %965
    %967 = vrot.lane.b32.xlu0 %v433, 120
    %v968 = vpop.permute.xlu0 %967
    %969 = vrot.lane.b32.xlu0 %v436, 120
    %v970 = vpop.permute.xlu0 %969
    %971 = vrot.lane.b32.xlu0 %v439, 120
    %v972 = vpop.permute.xlu0 %971
    %973 = vrot.lane.b32.xlu0 %v442, 120
    %v974 = vpop.permute.xlu0 %973
    %975 = vrot.lane.b32.xlu0 %v445, 120
    %v976 = vpop.permute.xlu0 %975
    %977 = vrot.lane.b32.xlu0 %v448, 120
    %v978 = vpop.permute.xlu0 %977
    %979 = vrot.lane.b32.xlu0 %v451, 120
    %v980 = vpop.permute.xlu0 %979
    %981 = vrot.lane.b32.xlu0 %v454, 120
    %v982 = vpop.permute.xlu0 %981
    %983 = vrot.lane.b32.xlu0 %v457, 120
    %v984 = vpop.permute.xlu0 %983
    %985 = vrot.lane.b32.xlu0 %v460, 120
    %v986 = vpop.permute.xlu0 %985
    %987 = vrot.lane.b32.xlu0 %v463, 120
    %v988 = vpop.permute.xlu0 %987
    %989 = vrot.lane.b32.xlu0 %v466, 120
    %v990 = vpop.permute.xlu0 %989
    %991 = vrot.lane.b32.xlu0 %v469, 120
    %v992 = vpop.permute.xlu0 %991
    %993 = vrot.lane.b32.xlu0 %v472, 120
    %v994 = vpop.permute.xlu0 %993
    %995 = vrot.lane.b32.xlu0 %v475, 120
    %v996 = vpop.permute.xlu0 %995
    %997 = vrot.lane.b32.xlu0 %v478, 120
    %v998 = vpop.permute.xlu0 %997
    %999 = vrot.lane.b32.xlu0 %v481, 120
    %v1000 = vpop.permute.xlu0 %999
    %1001 = vrot.lane.b32.xlu0 %v484, 120
    %v1002 = vpop.permute.xlu0 %1001
    %1003 = vrot.lane.b32.xlu0 %v487, 120
    %v1004 = vpop.permute.xlu0 %1003
    %1005 = vrot.lane.b32.xlu0 %v490, 120
    %v1006 = vpop.permute.xlu0 %1005
    %1007 = vrot.lane.b32.xlu0 %v493, 120
    %v1008 = vpop.permute.xlu0 %1007
    %1009 = vrot.lane.b32.xlu0 %v496, 120
    %v1010 = vpop.permute.xlu0 %1009
    %v1075 = vadd.f32 %v307, %v884
    %v1076 = vadd.f32 %v310, %v886
    %v1077 = vadd.f32 %v313, %v888
    %v1078 = vadd.f32 %v316, %v890
    %v1079 = vadd.f32 %v319, %v892
    %v1080 = vadd.f32 %v322, %v894
    %v1081 = vadd.f32 %v325, %v896
    %v1082 = vadd.f32 %v328, %v898
    %v1083 = vadd.f32 %v331, %v900
    %v1084 = vadd.f32 %v334, %v902
    %v1085 = vadd.f32 %v337, %v904
    %v1086 = vadd.f32 %v340, %v906
    %v1087 = vadd.f32 %v343, %v908
    %v1088 = vadd.f32 %v346, %v910
    %v1089 = vadd.f32 %v349, %v912
    %v1090 = vadd.f32 %v352, %v914
    %v1091 = vadd.f32 %v355, %v916
    %v1092 = vadd.f32 %v358, %v918
    %v1093 = vadd.f32 %v361, %v920
    %v1094 = vadd.f32 %v364, %v922
    %v1095 = vadd.f32 %v367, %v924
    %v1096 = vadd.f32 %v370, %v926
    %v1097 = vadd.f32 %v373, %v928
    %v1098 = vadd.f32 %v376, %v930
    %v1099 = vadd.f32 %v379, %v932
    %v1100 = vadd.f32 %v382, %v934
    %v1101 = vadd.f32 %v385, %v936
    %v1102 = vadd.f32 %v388, %v938
    %v1103 = vadd.f32 %v391, %v940
    %v1104 = vadd.f32 %v394, %v942
    %v1105 = vadd.f32 %v397, %v944
    %v1106 = vadd.f32 %v400, %v946
    %v1107 = vadd.f32 %v403, %v948
    %v1108 = vadd.f32 %v406, %v950
    %v1109 = vadd.f32 %v409, %v952
    %v1110 = vadd.f32 %v412, %v954
    %v1111 = vadd.f32 %v415, %v956
    %v1112 = vadd.f32 %v418, %v958
    %v1113 = vadd.f32 %v421, %v960
    %v1114 = vadd.f32 %v424, %v962
    %v1115 = vadd.f32 %v427, %v964
    %v1116 = vadd.f32 %v430, %v966
    %v1117 = vadd.f32 %v433, %v968
    %v1118 = vadd.f32 %v436, %v970
    %v1119 = vadd.f32 %v439, %v972
    %v1120 = vadd.f32 %v442, %v974
    %v1121 = vadd.f32 %v445, %v976
    %v1122 = vadd.f32 %v448, %v978
    %v1123 = vadd.f32 %v451, %v980
    %v1124 = vadd.f32 %v454, %v982
    %v1125 = vadd.f32 %v457, %v984
    %v1126 = vadd.f32 %v460, %v986
    %v1127 = vadd.f32 %v463, %v988
    %v1128 = vadd.f32 %v466, %v990
    %v1129 = vadd.f32 %v469, %v992
    %v1130 = vadd.f32 %v472, %v994
    %v1131 = vadd.f32 %v475, %v996
    %v1132 = vadd.f32 %v478, %v998
    %v1133 = vadd.f32 %v481, %v1000
    %v1134 = vadd.f32 %v484, %v1002
    %v1135 = vadd.f32 %v487, %v1004
    %v1136 = vadd.f32 %v490, %v1006
    %v1137 = vadd.f32 %v493, %v1008
    %v1138 = vadd.f32 %v496, %v1010
    %v1139 = vadd.f32 %v1075, %v819
    %v1140 = vadd.f32 %v1076, %v820
    %v1141 = vadd.f32 %v1077, %v821
    %v1142 = vadd.f32 %v1078, %v822
    %v1143 = vadd.f32 %v1079, %v823
    %v1144 = vadd.f32 %v1080, %v824
    %v1145 = vadd.f32 %v1081, %v825
    %v1146 = vadd.f32 %v1082, %v826
    %v1147 = vadd.f32 %v1083, %v827
    %v1148 = vadd.f32 %v1084, %v828
    %v1149 = vadd.f32 %v1085, %v829
    %v1150 = vadd.f32 %v1086, %v830
    %v1151 = vadd.f32 %v1087, %v831
    %v1152 = vadd.f32 %v1088, %v832
    %v1153 = vadd.f32 %v1089, %v833
    %v1154 = vadd.f32 %v1090, %v834
    %v1155 = vadd.f32 %v1091, %v835
    %v1156 = vadd.f32 %v1092, %v836
    %v1157 = vadd.f32 %v1093, %v837
    %v1158 = vadd.f32 %v1094, %v838
    %v1159 = vadd.f32 %v1095, %v839
    %v1160 = vadd.f32 %v1096, %v840
    %v1161 = vadd.f32 %v1097, %v841
    %v1162 = vadd.f32 %v1098, %v842
    %v1163 = vadd.f32 %v1099, %v843
    %v1164 = vadd.f32 %v1100, %v844
    %v1165 = vadd.f32 %v1101, %v845
    %v1166 = vadd.f32 %v1102, %v846
    %v1167 = vadd.f32 %v1103, %v847
    %v1168 = vadd.f32 %v1104, %v848
    %v1169 = vadd.f32 %v1105, %v849
    %v1170 = vadd.f32 %v1106, %v850
    %v1171 = vadd.f32 %v1107, %v851
    %v1172 = vadd.f32 %v1108, %v852
    %v1173 = vadd.f32 %v1109, %v853
    %v1174 = vadd.f32 %v1110, %v854
    %v1175 = vadd.f32 %v1111, %v855
    %v1176 = vadd.f32 %v1112, %v856
    %v1177 = vadd.f32 %v1113, %v857
    %v1178 = vadd.f32 %v1114, %v858
    %v1179 = vadd.f32 %v1115, %v859
    %v1180 = vadd.f32 %v1116, %v860
    %v1181 = vadd.f32 %v1117, %v861
    %v1182 = vadd.f32 %v1118, %v862
    %v1183 = vadd.f32 %v1119, %v863
    %v1184 = vadd.f32 %v1120, %v864
    %v1185 = vadd.f32 %v1121, %v865
    %v1186 = vadd.f32 %v1122, %v866
    %v1187 = vadd.f32 %v1123, %v867
    %v1188 = vadd.f32 %v1124, %v868
    %v1189 = vadd.f32 %v1125, %v869
    %v1190 = vadd.f32 %v1126, %v870
    %v1191 = vadd.f32 %v1127, %v871
    %v1192 = vadd.f32 %v1128, %v872
    %v1193 = vadd.f32 %v1129, %v873
    %v1194 = vadd.f32 %v1130, %v874
    %v1195 = vadd.f32 %v1131, %v875
    %v1196 = vadd.f32 %v1132, %v876
    %v1197 = vadd.f32 %v1133, %v877
    %v1198 = vadd.f32 %v1134, %v878
    %v1199 = vadd.f32 %v1135, %v879
    %v1200 = vadd.f32 %v1136, %v880
    %v1201 = vadd.f32 %v1137, %v881
    %v1202 = vadd.f32 %v1138, %v882
    %v1203 = vmul.f32 %v1139, 2.0
    %v1204 = vmul.f32 %v1141, 2.0
    %v1205 = vmul.f32 %v1143, 2.0
    %v1206 = vmul.f32 %v1145, 2.0
    %v1207 = vmul.f32 %v1147, 2.0
    %v1208 = vmul.f32 %v1149, 2.0
    %v1209 = vmul.f32 %v1151, 2.0
    %v1210 = vmul.f32 %v1153, 2.0
    %v1211 = vmul.f32 %v1155, 2.0
    %v1212 = vmul.f32 %v1157, 2.0
    %v1213 = vmul.f32 %v1159, 2.0
    %v1214 = vmul.f32 %v1161, 2.0
    %v1215 = vmul.f32 %v1163, 2.0
    %v1216 = vmul.f32 %v1165, 2.0
    %v1217 = vmul.f32 %v1167, 2.0
    %v1218 = vmul.f32 %v1169, 2.0
    %v1219 = vmul.f32 %v1171, 2.0
    %v1220 = vmul.f32 %v1173, 2.0
    %v1221 = vmul.f32 %v1175, 2.0
    %v1222 = vmul.f32 %v1177, 2.0
    %v1223 = vmul.f32 %v1179, 2.0
    %v1224 = vmul.f32 %v1181, 2.0
    %v1225 = vmul.f32 %v1183, 2.0
    %v1226 = vmul.f32 %v1185, 2.0
    %v1227 = vmul.f32 %v1187, 2.0
    %v1228 = vmul.f32 %v1189, 2.0
    %v1229 = vmul.f32 %v1191, 2.0
    %v1230 = vmul.f32 %v1193, 2.0
    %v1231 = vmul.f32 %v1195, 2.0
    %v1232 = vmul.f32 %v1197, 2.0
    %v1233 = vmul.f32 %v1199, 2.0
    %v1234 = vmul.f32 %v1201, 2.0
    %v1235 = vadd.f32 %v1203, %v1140
    %v1236 = vadd.f32 %v1204, %v1142
    %v1237 = vadd.f32 %v1205, %v1144
    %v1238 = vadd.f32 %v1206, %v1146
    %v1239 = vadd.f32 %v1207, %v1148
    %v1240 = vadd.f32 %v1208, %v1150
    %v1241 = vadd.f32 %v1209, %v1152
    %v1242 = vadd.f32 %v1210, %v1154
    %v1243 = vadd.f32 %v1211, %v1156
    %v1244 = vadd.f32 %v1212, %v1158
    %v1245 = vadd.f32 %v1213, %v1160
    %v1246 = vadd.f32 %v1214, %v1162
    %v1247 = vadd.f32 %v1215, %v1164
    %v1248 = vadd.f32 %v1216, %v1166
    %v1249 = vadd.f32 %v1217, %v1168
    %v1250 = vadd.f32 %v1218, %v1170
    %v1251 = vadd.f32 %v1219, %v1172
    %v1252 = vadd.f32 %v1220, %v1174
    %v1253 = vadd.f32 %v1221, %v1176
    %v1254 = vadd.f32 %v1222, %v1178
    %v1255 = vadd.f32 %v1223, %v1180
    %v1256 = vadd.f32 %v1224, %v1182
    %v1257 = vadd.f32 %v1225, %v1184
    %v1258 = vadd.f32 %v1226, %v1186
    %v1259 = vadd.f32 %v1227, %v1188
    %v1260 = vadd.f32 %v1228, %v1190
    %v1261 = vadd.f32 %v1229, %v1192
    %v1262 = vadd.f32 %v1230, %v1194
    %v1263 = vadd.f32 %v1231, %v1196
    %v1264 = vadd.f32 %v1232, %v1198
    %v1265 = vadd.f32 %v1233, %v1200
    %v1266 = vadd.f32 %v1234, %v1202
    %v1267 = vadd.f32 %v1235, 0.0
    %v1268 = vadd.f32 %v1236, %v1140
    %v1269 = vadd.f32 %v1237, %v1142
    %v1270 = vadd.f32 %v1238, %v1144
    %v1271 = vadd.f32 %v1239, 0.0
    %v1272 = vadd.f32 %v1240, %v1148
    %v1273 = vadd.f32 %v1241, %v1150
    %v1274 = vadd.f32 %v1242, %v1152
    %v1275 = vadd.f32 %v1243, 0.0
    %v1276 = vadd.f32 %v1244, %v1156
    %v1277 = vadd.f32 %v1245, %v1158
    %v1278 = vadd.f32 %v1246, %v1160
    %v1279 = vadd.f32 %v1247, 0.0
    %v1280 = vadd.f32 %v1248, %v1164
    %v1281 = vadd.f32 %v1249, %v1166
    %v1282 = vadd.f32 %v1250, %v1168
    %v1283 = vadd.f32 %v1251, 0.0
    %v1284 = vadd.f32 %v1252, %v1172
    %v1285 = vadd.f32 %v1253, %v1174
    %v1286 = vadd.f32 %v1254, %v1176
    %v1287 = vadd.f32 %v1255, 0.0
    %v1288 = vadd.f32 %v1256, %v1180
    %v1289 = vadd.f32 %v1257, %v1182
    %v1290 = vadd.f32 %v1258, %v1184
    %v1291 = vadd.f32 %v1259, 0.0
    %v1292 = vadd.f32 %v1260, %v1188
    %v1293 = vadd.f32 %v1261, %v1190
    %v1294 = vadd.f32 %v1262, %v1192
    %v1295 = vadd.f32 %v1263, 0.0
    %v1296 = vadd.f32 %v1264, %v1196
    %v1297 = vadd.f32 %v1265, %v1198
    %v1298 = vadd.f32 %v1266, %v1200
    %vm1299 = vcmask 64512
    %1300 = vst.msk [vmem:[#allocation5] sm:$0xff] %vm1299, %v1267
    %1301 = vst.msk [vmem:[#allocation5 + $0x8] sm:$0xff] %vm1299, %v1268
    %1302 = vst.msk [vmem:[#allocation5 + $0x10] sm:$0xff] %vm1299, %v1269
    %1303 = vst.msk [vmem:[#allocation5 + $0x18] sm:$0xff] %vm1299, %v1270
    %1304 = vst.msk [vmem:[#allocation5 + $0x20] sm:$0xff] %vm1299, %v1271
    %1305 = vst.msk [vmem:[#allocation5 + $0x28] sm:$0xff] %vm1299, %v1272
    %1306 = vst.msk [vmem:[#allocation5 + $0x30] sm:$0xff] %vm1299, %v1273
    %1307 = vst.msk [vmem:[#allocation5 + $0x38] sm:$0xff] %vm1299, %v1274
    %1308 = vst.msk [vmem:[#allocation5 + $0x40] sm:$0xff] %vm1299, %v1275
    %1309 = vst.msk [vmem:[#allocation5 + $0x48] sm:$0xff] %vm1299, %v1276
    %1310 = vst.msk [vmem:[#allocation5 + $0x50] sm:$0xff] %vm1299, %v1277
    %1311 = vst.msk [vmem:[#allocation5 + $0x58] sm:$0xff] %vm1299, %v1278
    %1312 = vst.msk [vmem:[#allocation5 + $0x60] sm:$0xff] %vm1299, %v1279
    %1313 = vst.msk [vmem:[#allocation5 + $0x68] sm:$0xff] %vm1299, %v1280
    %1314 = vst.msk [vmem:[#allocation5 + $0x70] sm:$0xff] %vm1299, %v1281
    %1315 = vst.msk [vmem:[#allocation5 + $0x78] sm:$0xff] %vm1299, %v1282
    %1316 = vst.msk [vmem:[#allocation5 + $0x80] sm:$0xff] %vm1299, %v1283
    %1317 = vst.msk [vmem:[#allocation5 + $0x88] sm:$0xff] %vm1299, %v1284
    %1318 = vst.msk [vmem:[#allocation5 + $0x90] sm:$0xff] %vm1299, %v1285
    %1319 = vst.msk [vmem:[#allocation5 + $0x98] sm:$0xff] %vm1299, %v1286
    %1320 = vst.msk [vmem:[#allocation5 + $0xa0] sm:$0xff] %vm1299, %v1287
    %1321 = vst.msk [vmem:[#allocation5 + $0xa8] sm:$0xff] %vm1299, %v1288
    %1322 = vst.msk [vmem:[#allocation5 + $0xb0] sm:$0xff] %vm1299, %v1289
    %1323 = vst.msk [vmem:[#allocation5 + $0xb8] sm:$0xff] %vm1299, %v1290
    %1324 = vst.msk [vmem:[#allocation5 + $0xc0] sm:$0xff] %vm1299, %v1291
    %1325 = vst.msk [vmem:[#allocation5 + $0xc8] sm:$0xff] %vm1299, %v1292
    %1326 = vst.msk [vmem:[#allocation5 + $0xd0] sm:$0xff] %vm1299, %v1293
    %1327 = vst.msk [vmem:[#allocation5 + $0xd8] sm:$0xff] %vm1299, %v1294
    %1328 = vst.msk [vmem:[#allocation5 + $0xe0] sm:$0xff] %vm1299, %v1295
    %1329 = vst.msk [vmem:[#allocation5 + $0xe8] sm:$0xff] %vm1299, %v1296
    %1330 = vst.msk [vmem:[#allocation5 + $0xf0] sm:$0xff] %vm1299, %v1297
    %1331 = vst.msk [vmem:[#allocation5 + $0xf8] sm:$0xff] %vm1299, %v1298
    // Predicated region
    $region14: #{tpu_custom_call.1} parent=1 // pred_check
      _
    $region15: #{tpu_custom_call.1} parent=1 // pred_check_branch
      %1333 = sbr.rel (0) target = $region17
    $region16: #{tpu_custom_call.1} parent=1 // pred_region
      %1335 = vsyncadd [#allocation4], 0
      %s1336 = sshll.u32 [#allocation5], 4
      %s1337 = int_to_ptr.vmem [resolvable:$true] %s1336
      %s1338 = sshll.u32 %s2, 4
      %s1339 = int_to_ptr.hbm [resolvable:$true] %s1338
      %1344 = dma.vmem_to_hbm [thread:$0]  %s1337, 4096, %s1339, [#allocation4], 128, 128, 8
    $region17: #{tpu_custom_call.1} parent=1 // pred_fallthru
      _
    // Predicated region
    $region18: #{tpu_custom_call.1} parent=1 // pred_check
      _
    $region19: #{tpu_custom_call.1} parent=1 // pred_check_branch
      %1346 = sbr.rel (0) target = $region21
    $region20: #{tpu_custom_call.1} parent=1 // pred_region
      %1348 = dma.done [#allocation4], 4096
    $region21: #{tpu_custom_call.1} parent=1 // pred_fallthru
      _
    %1349 = vsyncpa [#allocation3], 1
    %1350 = vsyncpa [#allocation4], 1

</llo_original>
